<compile_context>
chip_gen: v6e
topology: v6e:2x2x1
jax: 0.10.0
libtpu: 0.0.40
codegen_flags: <defaults>
</compile_context>

<pallas_src>
import jax
import jax.numpy as jnp
import numpy as np
from jax.experimental import pallas as pl
from jax.experimental.pallas import tpu as pltpu


# Probe once whether this JAX exposes pipeline_mode / pl.Buffered so the
# grid-invariant weight blocks can be single-buffered (halves their VMEM).
try:
    pl.BlockSpec((8, 128), lambda i: (0, 0), pipeline_mode=pl.Buffered(1))
    _HAS_BUFFERED = True
except Exception:            # older JAX: fall back to default double-buffering
    _HAS_BUFFERED = False


def _const_spec(shape):
    """BlockSpec for a grid-invariant (weight / bias) operand."""
    ndim = len(shape)
    index_map = lambda i, _n=ndim: (0,) * _n
    if _HAS_BUFFERED:
        return pl.BlockSpec(shape, index_map, pipeline_mode=pl.Buffered(1))
    return pl.BlockSpec(shape, index_map)


# ----------------------------- Pallas kernel ------------------------------ #
def _cnn_kernel(xcol_ref, w1_ref, b1_ref, w2_ref, b2_ref,
                wf1_ref, bf1_ref, wf2_ref, bf2_ref, wf3_ref, bf3_ref,
                out_ref):
    f32 = jnp.float32
    T4, Bt, K1 = xcol_ref.shape
    M2 = T4 * Bt                       # rows are t-major: row = t*Bt + b

    # conv1 + ReLU + MaxPool1d(2) + conv2-im2col: one matmul + one max.
    # Lanes 0:128 of y1 hold conv1 at the even position of each of the 4
    # pool1 pairs a pool2 window needs, lanes 128:256 the odd position;
    # pool1 is the max of the halves (ReLU commutes with max), and the
    # result is exactly the conv2 im2col row: h1[2t-1..2t+2] x 32 channels.
    xcol = xcol_ref[...].reshape(M2, K1)
    y1 = jnp.dot(xcol, w1_ref[...], preferred_element_type=f32) + b1_ref[...]
    col2 = jnp.maximum(jnp.maximum(y1[:, :128], y1[:, 128:]), 0.0)  # (M2,128)

    # conv2's zero padding of the pooled feature map: h1[-1] (lane block 0 of
    # the t==0 rows) and h1[T//2] (lane block 3 of the t==T4-1 rows) are 0.
    rows = jax.lax.broadcasted_iota(jnp.int32, (M2, 128), 0)
    lanes = jax.lax.broadcasted_iota(jnp.int32, (M2, 128), 1)
    keep = jnp.logical_and(jnp.logical_or(rows >= Bt, lanes >= 32),
                           jnp.logical_or(rows < M2 - Bt, lanes < 96))
    col2 = jnp.where(keep, col2, 0.0)

    # conv2 + ReLU + MaxPool1d(2): one (M2,128)@(128,128) matmul + one max.
    y2 = jnp.dot(col2, w2_ref[...], preferred_element_type=f32) + b2_ref[...]
    h2 = jnp.maximum(jnp.maximum(y2[:, :64], y2[:, 64:]), 0.0)      # (M2, 64)

    # fc1 fused with the channel-major flatten: contract over (t, channel) as
    # T4 accumulated, sublane-aligned (Bt,64)@(64,128) matmuls — no lane
    # concat / relayout of the pooled feature map.
    acc = jnp.zeros((Bt, 128), f32)
    for t in range(T4):
        acc = acc + jnp.dot(h2[t * Bt:(t + 1) * Bt, :],
                            wf1_ref[t * 64:(t + 1) * 64, :],
                            preferred_element_type=f32)
    z = jnp.maximum(acc + bf1_ref[...], 0.0)                        # (Bt,128)

    # fc2 + ReLU, then fc3.  nn.Dropout(0.2) is identity at inference.
    # TODO(synk): training-mode stochastic dropout masking is not implemented.
    z = jnp.maximum(jnp.dot(z, wf2_ref[...], preferred_element_type=f32)
                    + bf2_ref[...], 0.0)
    z = jnp.dot(z, wf3_ref[...], preferred_element_type=f32) + bf3_ref[...]
    out_ref[...] = z.astype(out_ref.dtype)                          # (Bt,128)


# ------------------------------- Wrapper ----------------------------------- #
def cnn_forward(x_ncl, params, *, batch_block=None):
    B, cin, T = x_ncl.shape
    if T % 4 != 0:
        raise ValueError("kernel requires n_timesteps % 4 == 0 "
                         "(matches PyTorch floor-mode pooling exactly)")
    T4 = T // 4
    n_out = params["fc3_w"].shape[0]
    f32 = jnp.float32
    K1 = 10 * cin

    # ---- input layout plumbing: one row per (pool2-window, sample) ----------
    # Window t needs input positions 4t-3 .. 4t+6 (10 taps, zero padded).
    x_tc = jnp.transpose(x_ncl, (0, 2, 1)).astype(f32)            # (B, T, Cin)
    xp = jnp.pad(x_tc, ((0, 0), (3, 3), (0, 0)))                  # (B, T+6, Cin)
    xcol = jnp.stack([xp[:, 4 * t:4 * t + 10, :].reshape(B, K1)
                      for t in range(T4)], axis=0)                # (T4, B, K1)

    # ---- conv1 weights: (10*Cin, 256) block structure ------------------------
    # Output lane block j (j=0..3) = conv1 at window offset 1+2j (even member
    # of pool1 pair j), lane block 4+j = offset 2+2j (odd member); max of the
    # two 128-lane halves then yields h1[2t-1..2t+2] packed in 128 lanes.
    w1k = jnp.transpose(params["conv1_w"], (2, 1, 0)).reshape(3 * cin, 32)
    w1p = jnp.zeros((K1, 256), f32)
    for j in range(4):
        oe, oo = 1 + 2 * j, 2 + 2 * j
        w1p = w1p.at[(oe - 1) * cin:(oe + 2) * cin,
                     j * 32:(j + 1) * 32].set(w1k)
        w1p = w1p.at[(oo - 1) * cin:(oo + 2) * cin,
                     128 + j * 32:128 + (j + 1) * 32].set(w1k)
    b1p = jnp.tile(params["conv1_b"].astype(f32), 8).reshape(1, 256)

    # ---- conv2 weights: (128, 128) block structure (both pool2 positions) ---
    w2f = jnp.transpose(params["conv2_w"], (2, 1, 0)).reshape(96, 64)
    w2p = jnp.zeros((128, 128), f32)
    w2p = w2p.at[0:96, 0:64].set(w2f)         # conv2 output at position 2t
    w2p = w2p.at[32:128, 64:128].set(w2f)     # conv2 output at position 2t+1
    b2p = jnp.tile(params["conv2_b"].astype(f32), 2).reshape(1, 128)

    # ---- fc weights: fc1 repacked for the t-major accumulation, all output
    #      widths zero-padded to 128 lanes (lane-dense stores). ---------------
    wf1 = jnp.transpose(params["fc1_w"].reshape(50, 64, T4),
                        (2, 1, 0)).reshape(T4 * 64, 50)           # row = t*64+c
    wf1p = jnp.zeros((T4 * 64, 128), f32).at[:, :50].set(wf1)
    bf1p = jnp.zeros((1, 128), f32).at[0, :50].set(params["fc1_b"])
    wf2p = jnp.zeros((128, 128), f32).at[:50, :100].set(params["fc2_w"].T)
    bf2p = jnp.zeros((1, 128), f32).at[0, :100].set(params["fc2_b"])
    wf3p = jnp.zeros((128, 128), f32).at[:100, :n_out].set(params["fc3_w"].T)
    bf3p = jnp.zeros((1, 128), f32).at[0, :n_out].set(params["fc3_b"])

    weights = (w1p, b1p, w2p, b2p, wf1p, bf1p, wf2p, bf2p, wf3p, bf3p)
    weight_elems = sum(int(np.prod(w.shape)) for w in weights)
    wbuf = 1 if _HAS_BUFFERED else 2

    # ---- batch tiling: multiple of 8, >=2 grid steps when possible (so both
    #      v7x TensorCores get work), shrunk to fit the chip's VMEM. ----------
    Bp8 = max(8, ((B + 7) // 8) * 8)
    if batch_block is not None:
        Bt = max(8, min(((batch_block + 7) // 8) * 8, Bp8))
    elif Bp8 <= 8:
        Bt = 8
    else:
        Bt = min(128, ((Bp8 // 2 + 7) // 8) * 8)

    try:
        vmem_cap = int(pltpu.get_tpu_info().vmem_capacity_bytes)
    except Exception:
        vmem_cap = 64 * 1024 * 1024          # safe lower bound (v7x physical)

    def est_bytes(bt):
        m2 = T4 * bt
        return 4 * (2 * m2 * 128             # xcol block (lane-padded), 2 bufs
                    + m2 * (256 + 4 * 128)   # y1 / col2 / y2 / h2
                    + 2 * bt * 128           # out block, 2 bufs
                    + 4 * bt * 128           # fc intermediates / headroom
                    + wbuf * weight_elems)

    budget = int(vmem_cap * 0.6)
    while Bt > 8 and est_bytes(Bt) > budget:
        Bt = max(8, ((Bt // 2) // 8) * 8)
    Bp = ((Bp8 + Bt - 1) // Bt) * Bt
    if Bp != B:
        xcol = jnp.pad(xcol, ((0, 0), (0, Bp - B), (0, 0)))
    vmem_limit = int(max(32 * 1024 * 1024,
                         min(2 * est_bytes(Bt), vmem_cap * 4 // 5)))

    flops = 2 * Bp * (T4 * (K1 * 256 + 128 * 128 + 64 * 128) + 2 * 128 * 128)
    bytes_accessed = 4 * (Bp * T4 * K1 + weight_elems + Bp * 128)

    out = pl.pallas_call(
        _cnn_kernel,
        out_shape=jax.ShapeDtypeStruct((Bp, 128), f32),
        grid=(Bp // Bt,),
        in_specs=[
            pl.BlockSpec((T4, Bt, K1), lambda i: (0, i, 0)),
            _const_spec((K1, 256)), _const_spec((1, 256)),
            _const_spec((128, 128)), _const_spec((1, 128)),
            _const_spec((T4 * 64, 128)), _const_spec((1, 128)),
            _const_spec((128, 128)), _const_spec((1, 128)),
            _const_spec((128, 128)), _const_spec((1, 128)),
        ],
        out_specs=pl.BlockSpec((Bt, 128), lambda i: (i, 0)),
        compiler_params=pltpu.CompilerParams(
            dimension_semantics=("parallel",),
            vmem_limit_bytes=vmem_limit),
        cost_estimate=pl.CostEstimate(flops=int(flops), transcendentals=0,
                                      bytes_accessed=int(bytes_accessed)),
    )(xcol, *weights)
    return out[:B, :n_out]                                         # (B, n_out)


# ------------------------- Pure-JAX reference ------------------------------ #
def reference_forward(x_ncl, params):
    def conv1d_same(x, w, b):
        y = jax.lax.conv_general_dilated(
            x, w, window_strides=(1,), padding=((1, 1),),
            dimension_numbers=("NCH", "OIH", "NCH"))
        return y + b[None, :, None]

    B = x_ncl.shape[0]
    h = jax.nn.relu(conv1d_same(x_ncl, params["conv1_w"], params["conv1_b"]))
    h = h.reshape(B, h.shape[1], -1, 2).max(axis=-1)               # MaxPool1d(2)
    h = jax.nn.relu(conv1d_same(h, params["conv2_w"], params["conv2_b"]))
    h = h.reshape(B, h.shape[1], -1, 2).max(axis=-1)
    flat = h.reshape(B, -1)        # == torch reshape([-1, L, C]) + Flatten
    z = jax.nn.relu(flat @ params["fc1_w"].T + params["fc1_b"])
    z = jax.nn.relu(z @ params["fc2_w"].T + params["fc2_b"])
    return z @ params["fc3_w"].T + params["fc3_b"]


# --------------------------- Deterministic init ---------------------------- #
def init_params(key, n_timesteps, n_features, n_outputs):
    ks = jax.random.split(key, 10)
    flatten_size = 64 * (n_timesteps // 4)

    def winit(k, shape, fan_in):
        return (jax.random.uniform(k, shape, jnp.float32, -1.0, 1.0)
                / jnp.sqrt(jnp.float32(fan_in)))

    return dict(
        conv1_w=winit(ks[0], (32, n_features, 3), n_features * 3),
        conv1_b=winit(ks[1], (32,), n_features * 3),
        conv2_w=winit(ks[2], (64, 32, 3), 32 * 3),
        conv2_b=winit(ks[3], (64,), 32 * 3),
        fc1_w=winit(ks[4], (50, flatten_size), flatten_size),
        fc1_b=winit(ks[5], (50,), flatten_size),
        fc2_w=winit(ks[6], (100, 50), 50),
        fc2_b=winit(ks[7], (100,), 50),
        fc3_w=winit(ks[8], (n_outputs, 100), 100),
        fc3_b=winit(ks[9], (n_outputs,), 100),
    )


if __name__ == "__main__":
    B, n_features, n_timesteps, n_outputs = 2, 4, 16, 5

    key = jax.random.PRNGKey(0)
    pkey, xkey = jax.random.split(key)
    params = init_params(pkey, n_timesteps, n_features, n_outputs)
    x = jax.random.normal(xkey, (B, n_features, n_timesteps), jnp.float32)

    out = jax.block_until_ready(jax.jit(cnn_forward)(x, params))
    ref = jax.block_until_ready(reference_forward(x, params))

    assert out.shape == (B, n_outputs), out.shape
    if not np.allclose(np.asarray(out), np.asarray(ref), atol=5e-4, rtol=5e-4):
        raise AssertionError(
            f"Pallas kernel mismatch vs reference:\n{out}\nvs\n{ref}")
    print("KERNEL_OK")
</pallas_src>

<mosaic_0001>
module attributes {stable_mosaic.version = 11 : i64} {
  func.func @_cnn_kernel(%arg0: i32, %arg1: memref<4x8x40xf32, #tpu.memory_space<vmem>>, %arg2: memref<40x256xf32, #tpu.memory_space<vmem>>, %arg3: memref<1x256xf32, #tpu.memory_space<vmem>>, %arg4: memref<128x128xf32, #tpu.memory_space<vmem>>, %arg5: memref<1x128xf32, #tpu.memory_space<vmem>>, %arg6: memref<256x128xf32, #tpu.memory_space<vmem>>, %arg7: memref<1x128xf32, #tpu.memory_space<vmem>>, %arg8: memref<128x128xf32, #tpu.memory_space<vmem>>, %arg9: memref<1x128xf32, #tpu.memory_space<vmem>>, %arg10: memref<128x128xf32, #tpu.memory_space<vmem>>, %arg11: memref<1x128xf32, #tpu.memory_space<vmem>>, %arg12: memref<8x128xf32, #tpu.memory_space<vmem>>) attributes {dimension_semantics = [#tpu.dimension_semantics<parallel>], iteration_bounds = array<i64: 1>, scalar_prefetch = 0 : i64, scratch_operands = 0 : i64, tpu.core_type = #tpu.core_type<tc>, window_params = [{transform_indices = @transform_0, window_bounds = array<i64: 4, 8, 40>}, {pipeline_mode = #tpu.pipeline_mode<synchronous>, transform_indices = @transform_1, window_bounds = array<i64: 40, 256>}, {pipeline_mode = #tpu.pipeline_mode<synchronous>, transform_indices = @transform_2, window_bounds = array<i64: 1, 256>}, {pipeline_mode = #tpu.pipeline_mode<synchronous>, transform_indices = @transform_3, window_bounds = array<i64: 128, 128>}, {pipeline_mode = #tpu.pipeline_mode<synchronous>, transform_indices = @transform_4, window_bounds = array<i64: 1, 128>}, {pipeline_mode = #tpu.pipeline_mode<synchronous>, transform_indices = @transform_5, window_bounds = array<i64: 256, 128>}, {pipeline_mode = #tpu.pipeline_mode<synchronous>, transform_indices = @transform_6, window_bounds = array<i64: 1, 128>}, {pipeline_mode = #tpu.pipeline_mode<synchronous>, transform_indices = @transform_7, window_bounds = array<i64: 128, 128>}, {pipeline_mode = #tpu.pipeline_mode<synchronous>, transform_indices = @transform_8, window_bounds = array<i64: 1, 128>}, {pipeline_mode = #tpu.pipeline_mode<synchronous>, transform_indices = @transform_9, window_bounds = array<i64: 128, 128>}, {pipeline_mode = #tpu.pipeline_mode<synchronous>, transform_indices = @transform_10, window_bounds = array<i64: 1, 128>}, {transform_indices = @transform_11, window_bounds = array<i64: 8, 128>}]} {
    %c0 = arith.constant 0 : index
    %c0_0 = arith.constant 0 : index
    %c0_1 = arith.constant 0 : index
    %0 = vector.load %arg1[%c0, %c0_0, %c0_1] : memref<4x8x40xf32, #tpu.memory_space<vmem>>, vector<4x8x40xf32>
    %1 = vector.shape_cast %0 : vector<4x8x40xf32> to vector<32x40xf32>
    %c0_2 = arith.constant 0 : index
    %c0_3 = arith.constant 0 : index
    %2 = vector.load %arg2[%c0_2, %c0_3] : memref<40x256xf32, #tpu.memory_space<vmem>>, vector<40x256xf32>
    %cst = arith.constant dense<0.000000e+00> : vector<32x256xf32>
    %3 = tpu.matmul %1, %2, %cst {dimension_numbers = #tpu.dot_dimension_numbers<[1], [0], [0], [1], [0, 0, 1, 1], [], []>} : vector<32x40xf32>, vector<40x256xf32>, vector<32x256xf32> -> vector<32x256xf32>
    %c0_4 = arith.constant 0 : index
    %c0_5 = arith.constant 0 : index
    %4 = vector.load %arg3[%c0_4, %c0_5] : memref<1x256xf32, #tpu.memory_space<vmem>>, vector<1x256xf32>
    %5 = vector.broadcast %4 : vector<1x256xf32> to vector<32x256xf32>
    %6 = arith.addf %3, %5 : vector<32x256xf32>
    %7 = vector.extract_strided_slice %6 {offsets = [0, 0], sizes = [32, 128], strides = [1, 1]} : vector<32x256xf32> to vector<32x128xf32>
    %8 = vector.extract_strided_slice %6 {offsets = [0, 128], sizes = [32, 128], strides = [1, 1]} : vector<32x256xf32> to vector<32x128xf32>
    %9 = arith.maximumf %7, %8 : vector<32x128xf32>
    %cst_6 = arith.constant 0.000000e+00 : f32
    %10 = vector.broadcast %cst_6 : f32 to vector<32x128xf32>
    %11 = arith.maximumf %9, %10 : vector<32x128xf32>
    %12 = tpu.iota {dimensions = array<i32: 0>} : vector<32x128xi32>
    %13 = tpu.iota {dimensions = array<i32: 1>} : vector<32x128xi32>
    %c8_i32 = arith.constant 8 : i32
    %14 = vector.broadcast %c8_i32 : i32 to vector<32x128xi32>
    %15 = arith.cmpi sge, %12, %14 : vector<32x128xi32>
    %c32_i32 = arith.constant 32 : i32
    %16 = vector.broadcast %c32_i32 : i32 to vector<32x128xi32>
    %17 = arith.cmpi sge, %13, %16 : vector<32x128xi32>
    %18 = arith.ori %15, %17 : vector<32x128xi1>
    %c24_i32 = arith.constant 24 : i32
    %19 = vector.broadcast %c24_i32 : i32 to vector<32x128xi32>
    %20 = arith.cmpi slt, %12, %19 : vector<32x128xi32>
    %c96_i32 = arith.constant 96 : i32
    %21 = vector.broadcast %c96_i32 : i32 to vector<32x128xi32>
    %22 = arith.cmpi slt, %13, %21 : vector<32x128xi32>
    %23 = arith.ori %20, %22 : vector<32x128xi1>
    %24 = arith.andi %18, %23 : vector<32x128xi1>
    %cst_7 = arith.constant 0.000000e+00 : f32
    %25 = vector.broadcast %cst_7 : f32 to vector<32x128xf32>
    %26 = arith.select %24, %11, %25 : vector<32x128xi1>, vector<32x128xf32>
    %c0_8 = arith.constant 0 : index
    %c0_9 = arith.constant 0 : index
    %27 = vector.load %arg4[%c0_8, %c0_9] : memref<128x128xf32, #tpu.memory_space<vmem>>, vector<128x128xf32>
    %cst_10 = arith.constant dense<0.000000e+00> : vector<32x128xf32>
    %28 = tpu.matmul %26, %27, %cst_10 {dimension_numbers = #tpu.dot_dimension_numbers<[1], [0], [0], [1], [0, 0, 1, 1], [], []>} : vector<32x128xf32>, vector<128x128xf32>, vector<32x128xf32> -> vector<32x128xf32>
    %c0_11 = arith.constant 0 : index
    %c0_12 = arith.constant 0 : index
    %29 = vector.load %arg5[%c0_11, %c0_12] : memref<1x128xf32, #tpu.memory_space<vmem>>, vector<1x128xf32>
    %30 = vector.broadcast %29 : vector<1x128xf32> to vector<32x128xf32>
    %31 = arith.addf %28, %30 : vector<32x128xf32>
    %32 = vector.extract_strided_slice %31 {offsets = [0, 0], sizes = [32, 64], strides = [1, 1]} : vector<32x128xf32> to vector<32x64xf32>
    %33 = vector.extract_strided_slice %31 {offsets = [0, 64], sizes = [32, 64], strides = [1, 1]} : vector<32x128xf32> to vector<32x64xf32>
    %34 = arith.maximumf %32, %33 : vector<32x64xf32>
    %cst_13 = arith.constant 0.000000e+00 : f32
    %35 = vector.broadcast %cst_13 : f32 to vector<32x64xf32>
    %36 = arith.maximumf %34, %35 : vector<32x64xf32>
    %cst_14 = arith.constant 0.000000e+00 : f32
    %37 = vector.broadcast %cst_14 : f32 to vector<8x128xf32>
    %38 = vector.extract_strided_slice %36 {offsets = [0, 0], sizes = [8, 64], strides = [1, 1]} : vector<32x64xf32> to vector<8x64xf32>
    %c0_15 = arith.constant 0 : index
    %c0_16 = arith.constant 0 : index
    %39 = vector.load %arg6[%c0_15, %c0_16] : memref<256x128xf32, #tpu.memory_space<vmem>>, vector<64x128xf32>
    %cst_17 = arith.constant dense<0.000000e+00> : vector<8x128xf32>
    %40 = tpu.matmul %38, %39, %cst_17 {dimension_numbers = #tpu.dot_dimension_numbers<[1], [0], [0], [1], [0, 0, 1, 1], [], []>} : vector<8x64xf32>, vector<64x128xf32>, vector<8x128xf32> -> vector<8x128xf32>
    %41 = arith.addf %37, %40 : vector<8x128xf32>
    %42 = vector.extract_strided_slice %36 {offsets = [8, 0], sizes = [8, 64], strides = [1, 1]} : vector<32x64xf32> to vector<8x64xf32>
    %c64 = arith.constant 64 : index
    %c0_18 = arith.constant 0 : index
    %43 = vector.load %arg6[%c64, %c0_18] : memref<256x128xf32, #tpu.memory_space<vmem>>, vector<64x128xf32>
    %cst_19 = arith.constant dense<0.000000e+00> : vector<8x128xf32>
    %44 = tpu.matmul %42, %43, %cst_19 {dimension_numbers = #tpu.dot_dimension_numbers<[1], [0], [0], [1], [0, 0, 1, 1], [], []>} : vector<8x64xf32>, vector<64x128xf32>, vector<8x128xf32> -> vector<8x128xf32>
    %45 = arith.addf %41, %44 : vector<8x128xf32>
    %46 = vector.extract_strided_slice %36 {offsets = [16, 0], sizes = [8, 64], strides = [1, 1]} : vector<32x64xf32> to vector<8x64xf32>
    %c128 = arith.constant 128 : index
    %c0_20 = arith.constant 0 : index
    %47 = vector.load %arg6[%c128, %c0_20] : memref<256x128xf32, #tpu.memory_space<vmem>>, vector<64x128xf32>
    %cst_21 = arith.constant dense<0.000000e+00> : vector<8x128xf32>
    %48 = tpu.matmul %46, %47, %cst_21 {dimension_numbers = #tpu.dot_dimension_numbers<[1], [0], [0], [1], [0, 0, 1, 1], [], []>} : vector<8x64xf32>, vector<64x128xf32>, vector<8x128xf32> -> vector<8x128xf32>
    %49 = arith.addf %45, %48 : vector<8x128xf32>
    %50 = vector.extract_strided_slice %36 {offsets = [24, 0], sizes = [8, 64], strides = [1, 1]} : vector<32x64xf32> to vector<8x64xf32>
    %c192 = arith.constant 192 : index
    %c0_22 = arith.constant 0 : index
    %51 = vector.load %arg6[%c192, %c0_22] : memref<256x128xf32, #tpu.memory_space<vmem>>, vector<64x128xf32>
    %cst_23 = arith.constant dense<0.000000e+00> : vector<8x128xf32>
    %52 = tpu.matmul %50, %51, %cst_23 {dimension_numbers = #tpu.dot_dimension_numbers<[1], [0], [0], [1], [0, 0, 1, 1], [], []>} : vector<8x64xf32>, vector<64x128xf32>, vector<8x128xf32> -> vector<8x128xf32>
    %53 = arith.addf %49, %52 : vector<8x128xf32>
    %c0_24 = arith.constant 0 : index
    %c0_25 = arith.constant 0 : index
    %54 = vector.load %arg7[%c0_24, %c0_25] : memref<1x128xf32, #tpu.memory_space<vmem>>, vector<1x128xf32>
    %55 = vector.broadcast %54 : vector<1x128xf32> to vector<8x128xf32>
    %56 = arith.addf %53, %55 : vector<8x128xf32>
    %cst_26 = arith.constant 0.000000e+00 : f32
    %57 = vector.broadcast %cst_26 : f32 to vector<8x128xf32>
    %58 = arith.maximumf %56, %57 : vector<8x128xf32>
    %c0_27 = arith.constant 0 : index
    %c0_28 = arith.constant 0 : index
    %59 = vector.load %arg8[%c0_27, %c0_28] : memref<128x128xf32, #tpu.memory_space<vmem>>, vector<128x128xf32>
    %cst_29 = arith.constant dense<0.000000e+00> : vector<8x128xf32>
    %60 = tpu.matmul %58, %59, %cst_29 {dimension_numbers = #tpu.dot_dimension_numbers<[1], [0], [0], [1], [0, 0, 1, 1], [], []>} : vector<8x128xf32>, vector<128x128xf32>, vector<8x128xf32> -> vector<8x128xf32>
    %c0_30 = arith.constant 0 : index
    %c0_31 = arith.constant 0 : index
    %61 = vector.load %arg9[%c0_30, %c0_31] : memref<1x128xf32, #tpu.memory_space<vmem>>, vector<1x128xf32>
    %62 = vector.broadcast %61 : vector<1x128xf32> to vector<8x128xf32>
    %63 = arith.addf %60, %62 : vector<8x128xf32>
    %cst_32 = arith.constant 0.000000e+00 : f32
    %64 = vector.broadcast %cst_32 : f32 to vector<8x128xf32>
    %65 = arith.maximumf %63, %64 : vector<8x128xf32>
    %c0_33 = arith.constant 0 : index
    %c0_34 = arith.constant 0 : index
    %66 = vector.load %arg10[%c0_33, %c0_34] : memref<128x128xf32, #tpu.memory_space<vmem>>, vector<128x128xf32>
    %cst_35 = arith.constant dense<0.000000e+00> : vector<8x128xf32>
    %67 = tpu.matmul %65, %66, %cst_35 {dimension_numbers = #tpu.dot_dimension_numbers<[1], [0], [0], [1], [0, 0, 1, 1], [], []>} : vector<8x128xf32>, vector<128x128xf32>, vector<8x128xf32> -> vector<8x128xf32>
    %c0_36 = arith.constant 0 : index
    %c0_37 = arith.constant 0 : index
    %68 = vector.load %arg11[%c0_36, %c0_37] : memref<1x128xf32, #tpu.memory_space<vmem>>, vector<1x128xf32>
    %69 = vector.broadcast %68 : vector<1x128xf32> to vector<8x128xf32>
    %70 = arith.addf %67, %69 : vector<8x128xf32>
    %c0_38 = arith.constant 0 : index
    %c0_39 = arith.constant 0 : index
    %71 = vector.load %arg12[%c0_38, %c0_39] : memref<8x128xf32, #tpu.memory_space<vmem>>, vector<8x128xf32>
    tpu.vector_store %arg12[%c0_38, %c0_39], %70 {strides = array<i32>} : memref<8x128xf32, #tpu.memory_space<vmem>>, vector<8x128xf32>,
    return
  }
  func.func @transform_0(%arg0: i32) -> (i32, i32, i32) {
    %c0_i32 = arith.constant 0 : i32
    %c0_i32_0 = arith.constant 0 : i32
    %c0_i32_1 = arith.constant 0 : i32
    return %c0_i32, %arg0, %c0_i32_0 : i32, i32, i32
  }
  func.func @transform_1(%arg0: i32) -> (i32, i32) {
    %c0_i32 = arith.constant 0 : i32
    %c0_i32_0 = arith.constant 0 : i32
    %c0_i32_1 = arith.constant 0 : i32
    return %c0_i32, %c0_i32_0 : i32, i32
  }
  func.func @transform_2(%arg0: i32) -> (i32, i32) {
    %c0_i32 = arith.constant 0 : i32
    %c0_i32_0 = arith.constant 0 : i32
    %c0_i32_1 = arith.constant 0 : i32
    return %c0_i32, %c0_i32_0 : i32, i32
  }
  func.func @transform_3(%arg0: i32) -> (i32, i32) {
    %c0_i32 = arith.constant 0 : i32
    %c0_i32_0 = arith.constant 0 : i32
    %c0_i32_1 = arith.constant 0 : i32
    return %c0_i32, %c0_i32_0 : i32, i32
  }
  func.func @transform_4(%arg0: i32) -> (i32, i32) {
    %c0_i32 = arith.constant 0 : i32
    %c0_i32_0 = arith.constant 0 : i32
    %c0_i32_1 = arith.constant 0 : i32
    return %c0_i32, %c0_i32_0 : i32, i32
  }
  func.func @transform_5(%arg0: i32) -> (i32, i32) {
    %c0_i32 = arith.constant 0 : i32
    %c0_i32_0 = arith.constant 0 : i32
    %c0_i32_1 = arith.constant 0 : i32
    return %c0_i32, %c0_i32_0 : i32, i32
  }
  func.func @transform_6(%arg0: i32) -> (i32, i32) {
    %c0_i32 = arith.constant 0 : i32
    %c0_i32_0 = arith.constant 0 : i32
    %c0_i32_1 = arith.constant 0 : i32
    return %c0_i32, %c0_i32_0 : i32, i32
  }
  func.func @transform_7(%arg0: i32) -> (i32, i32) {
    %c0_i32 = arith.constant 0 : i32
    %c0_i32_0 = arith.constant 0 : i32
    %c0_i32_1 = arith.constant 0 : i32
    return %c0_i32, %c0_i32_0 : i32, i32
  }
  func.func @transform_8(%arg0: i32) -> (i32, i32) {
    %c0_i32 = arith.constant 0 : i32
    %c0_i32_0 = arith.constant 0 : i32
    %c0_i32_1 = arith.constant 0 : i32
    return %c0_i32, %c0_i32_0 : i32, i32
  }
  func.func @transform_9(%arg0: i32) -> (i32, i32) {
    %c0_i32 = arith.constant 0 : i32
    %c0_i32_0 = arith.constant 0 : i32
    %c0_i32_1 = arith.constant 0 : i32
    return %c0_i32, %c0_i32_0 : i32, i32
  }
  func.func @transform_10(%arg0: i32) -> (i32, i32) {
    %c0_i32 = arith.constant 0 : i32
    %c0_i32_0 = arith.constant 0 : i32
    %c0_i32_1 = arith.constant 0 : i32
    return %c0_i32, %c0_i32_0 : i32, i32
  }
  func.func @transform_11(%arg0: i32) -> (i32, i32) {
    %c0_i32 = arith.constant 0 : i32
    %c0_i32_0 = arith.constant 0 : i32
    return %arg0, %c0_i32 : i32, i32
  }
}

</mosaic_0001>

<llo_original>
// kernel: tile.13
$region0: #{tile.13}
  #allocation0 [shape = 's32[1]{0}', space=sflag, size = 0x4, scoped, tag = 'scoped memory for tile.13']
  %s0 = inlined_call_operand.vmem [shape: f32[32], index: 0, kind: input, shape index: {}]
  %s1 = inlined_call_operand.vmem [shape: f32[8,32], index: 1, kind: output, shape index: {}]
  // Predicated region
  $region2: #{tile.13} parent=0 // pred_check
    _
  $region3: #{tile.13} parent=0 // pred_check_branch
    %3 = sbr.rel (0) target = $region5
  $region4: #{tile.13} parent=0 // pred_region
    _
  $region5: #{tile.13} parent=0 // pred_fallthru
    _
  %v4 = vld [vmem:[%s0] ss:$0 sm:$0xff]
  %5 = vst [vmem:[%s1] sm:$0xff] %v4

// kernel: tile.14
$region0: #{tile.14}
  %s0 = inlined_call_operand.vmem [shape: f32[8,32], index: 0, kind: input, shape index: {}]
  %s1 = inlined_call_operand.vmem [shape: f32[1,256], index: 1, kind: output, shape index: {}]
  $region1: #{tile.14} parent=0
    #allocation0 [shape = 'u8[8192]{0}', space=vmem, size = 0x2000, scoped, tag = 'scoped mem for output reshape']
    %s2 = smov 3
    %v3 = vld [vmem:[%s0] ss:$4 sm:%s2]
    %vm4 = vcmask 261120
    %5 = vst.msk [vmem:[#allocation0] ss:$8 sm:$0x3] %vm4, %v3
    %s6 = scalar_lea.vmem %s0, 3
    %s7 = smov 3
    %v8 = vld [vmem:[%s6] ss:$4 sm:%s7]
    %9 = vrot.lane.b32.xlu0 %v8, 96
    %v10 = vpop.permute.xlu0 %9
    %vm11 = vcmask 1048320
    %12 = vst.msk [vmem:[#allocation0] ss:$8 sm:$0x3] %vm11, %v10
    %s13 = scalar_lea.vmem %s0, 2
    %s14 = smov 3
    %v15 = vld [vmem:[%s13] ss:$4 sm:%s14]
    %16 = vrot.lane.b32.xlu0 %v15, 64
    %v17 = vpop.permute.xlu0 %16
    %vm18 = vcmask 785920
    %19 = vst.msk [vmem:[#allocation0] ss:$8 sm:$0x3] %vm18, %v17
    %s20 = scalar_lea.vmem %s0, 1
    %s21 = smov 3
    %v22 = vld [vmem:[%s20] ss:$4 sm:%s21]
    %23 = vrot.lane.b32.xlu0 %v22, 32
    %v24 = vpop.permute.xlu0 %23
    %vm25 = vcmask 523520
    %26 = vst.msk [vmem:[#allocation0] ss:$8 sm:$0x3] %vm25, %v24
    %s28 = sshll.u32 1, 1
    %s29 = ssub.s32 %s28, 1
    %v31 = vld [vmem:[#allocation0] sm:%s29]
    %s32 = sshll.u32 1, 1
    %s33 = ssub.s32 %s32, 1
    %34 = vst [vmem:[%s1] sm:%s33] %v31
    %s35 = scalar_lea.vmem [#allocation0], 8
    %v36 = vld [vmem:[%s35] sm:%s29]
    %s37 = sshll.u32 1, 1
    %s38 = ssub.s32 %s37, 1
    %s39 = scalar_lea.vmem %s1, 1
    %40 = vst [vmem:[%s39] sm:%s38] %v36

// kernel: tile.19
$region0: #{tile.19}
  %s0 = inlined_call_operand.vmem [shape: f32[2,64], index: 0, kind: input, shape index: {}]
  %s1 = inlined_call_operand.vmem [shape: f32[1,128], index: 1, kind: output, shape index: {}]
  $region1: #{tile.19} parent=0
    #allocation0 [shape = 'u8[4096]{0}', space=vmem, size = 0x1000, scoped, tag = 'scoped mem for output reshape']
    #allocation1 [shape = 'u8[4096]{0}', space=vmem, size = 0x1000, scoped, tag = 'scoped mem for input reshape']
    %s3 = sshll.u32 1, 2
    %s4 = ssub.s32 %s3, 1
    %v5 = vld [vmem:[%s0] sm:%s4]
    %6 = vst [vmem:[#allocation1] sm:%s4] %v5
    %v7 = vld [vmem:[#allocation1] sm:$0x1]
    %vm8 = vcmask 523264
    %9 = vst.msk [vmem:[#allocation0] sm:$0x1] %vm8, %v7
    %s10 = scalar_lea.vmem [#allocation1], 1
    %v11 = vld [vmem:[%s10] sm:$0x1]
    %12 = vrot.lane.b32.xlu0 %v11, 64
    %v13 = vpop.permute.xlu0 %12
    %vm14 = vcmask 1048064
    %15 = vst.msk [vmem:[#allocation0] sm:$0x1] %vm14, %v13
    %s17 = sshll.u32 1, 1
    %s18 = ssub.s32 %s17, 1
    %v20 = vld [vmem:[#allocation0] sm:%s18]
    %s21 = sshll.u32 1, 1
    %s22 = ssub.s32 %s21, 1
    %23 = vst [vmem:[%s1] sm:%s22] %v20

// kernel: tile.18
$region0: #{tile.18}
  #allocation0 [shape = 's32[1]{0}', space=sflag, size = 0x4, scoped, tag = 'scoped memory for tile.18']
  %s0 = inlined_call_operand.vmem [shape: f32[64], index: 0, kind: input, shape index: {}]
  %s1 = inlined_call_operand.vmem [shape: f32[2,64], index: 1, kind: output, shape index: {}]
  // Predicated region
  $region2: #{tile.18} parent=0 // pred_check
    _
  $region3: #{tile.18} parent=0 // pred_check_branch
    %3 = sbr.rel (0) target = $region5
  $region4: #{tile.18} parent=0 // pred_region
    _
  $region5: #{tile.18} parent=0 // pred_fallthru
    _
  %v4 = vld [vmem:[%s0] ss:$0 sm:$0xff]
  %5 = vst [vmem:[%s1] sm:$0x3] %v4

// kernel: cnn_forward.1
$region0: #{cnn_forward.1}
  #allocation0 [shape = 'u32[]', space=smem, size = 0x4, offset = 0x4, fixed_abs, tag = 'smem constant byte address 0x4 - core index']
  #allocation1 [shape = 'u32[144,128]{1,0:T(1,128)}', space=vmem, size = 0x12000, scoped, tag = 'internal scratch']
  %s0 = inlined_call_operand.vmem [shape: f32[4,8,40], index: 0, kind: input, shape index: {}]
  %s1 = inlined_call_operand.vmem [shape: f32[40,256], index: 1, kind: input, shape index: {}]
  %s2 = inlined_call_operand.vmem [shape: f32[1,256], index: 2, kind: input, shape index: {}]
  %s3 = inlined_call_operand.vmem [shape: f32[128,128], index: 3, kind: input, shape index: {}]
  %s4 = inlined_call_operand.vmem [shape: f32[1,128], index: 4, kind: input, shape index: {}]
  %s5 = inlined_call_operand.vmem [shape: f32[256,128], index: 5, kind: input, shape index: {}]
  %s6 = inlined_call_operand.vmem [shape: f32[1,128], index: 6, kind: input, shape index: {}]
  %s7 = inlined_call_operand.vmem [shape: f32[128,128], index: 7, kind: input, shape index: {}]
  %s8 = inlined_call_operand.vmem [shape: f32[1,128], index: 8, kind: input, shape index: {}]
  %s9 = inlined_call_operand.vmem [shape: f32[128,128], index: 9, kind: input, shape index: {}]
  %s10 = inlined_call_operand.vmem [shape: f32[1,128], index: 10, kind: input, shape index: {}]
  %s11 = inlined_call_operand.vmem [shape: f32[8,128], index: 11, kind: output, shape index: {}]
  %s12 = sld [smem:[#allocation0]]
  $region54: #{cnn_forward.1} parent=0
    _
  %s14 = ssub.s32 1, %s12
  %s15 = scalar_select 0, %s14, %s12
  // Predicated region
  $region2: #{cnn_forward.1} parent=0 // pred_check
    _
  $region3: #{cnn_forward.1} parent=0 // pred_check_branch
    %17 = sbr.rel (0) target = $region5
  $region4: #{cnn_forward.1} parent=0 // pred_region
    _
  $region5: #{cnn_forward.1} parent=0 // pred_fallthru
    _
  // Predicated region
  $region6: #{cnn_forward.1} parent=0 // pred_check
    _
  $region7: #{cnn_forward.1} parent=0 // pred_check_branch
    %19 = sbr.rel (0) target = $region9
  $region8: #{cnn_forward.1} parent=0 // pred_region
    _
  $region9: #{cnn_forward.1} parent=0 // pred_fallthru
    _
  // Predicated region
  $region10: #{cnn_forward.1} parent=0 // pred_check
    _
  $region11: #{cnn_forward.1} parent=0 // pred_check_branch
    %21 = sbr.rel (0) target = $region13
  $region12: #{cnn_forward.1} parent=0 // pred_region
    _
  $region13: #{cnn_forward.1} parent=0 // pred_fallthru
    _
  // Predicated region
  $region14: #{cnn_forward.1} parent=0 // pred_check
    _
  $region15: #{cnn_forward.1} parent=0 // pred_check_branch
    %23 = sbr.rel (0) target = $region17
  $region16: #{cnn_forward.1} parent=0 // pred_region
    _
  $region17: #{cnn_forward.1} parent=0 // pred_fallthru
    _
  // Predicated region
  $region18: #{cnn_forward.1} parent=0 // pred_check
    _
  $region19: #{cnn_forward.1} parent=0 // pred_check_branch
    %25 = sbr.rel (0) target = $region21
  $region20: #{cnn_forward.1} parent=0 // pred_region
    _
  $region21: #{cnn_forward.1} parent=0 // pred_fallthru
    _
  // Predicated region
  $region22: #{cnn_forward.1} parent=0 // pred_check
    _
  $region23: #{cnn_forward.1} parent=0 // pred_check_branch
    %27 = sbr.rel (0) target = $region25
  $region24: #{cnn_forward.1} parent=0 // pred_region
    _
  $region25: #{cnn_forward.1} parent=0 // pred_fallthru
    _
  // Predicated region
  $region26: #{cnn_forward.1} parent=0 // pred_check
    _
  $region27: #{cnn_forward.1} parent=0 // pred_check_branch
    %29 = sbr.rel (0) target = $region29
  $region28: #{cnn_forward.1} parent=0 // pred_region
    _
  $region29: #{cnn_forward.1} parent=0 // pred_fallthru
    _
  // Predicated region
  $region30: #{cnn_forward.1} parent=0 // pred_check
    _
  $region31: #{cnn_forward.1} parent=0 // pred_check_branch
    %31 = sbr.rel (0) target = $region33
  $region32: #{cnn_forward.1} parent=0 // pred_region
    _
  $region33: #{cnn_forward.1} parent=0 // pred_fallthru
    _
  // Predicated region
  $region34: #{cnn_forward.1} parent=0 // pred_check
    _
  $region35: #{cnn_forward.1} parent=0 // pred_check_branch
    %33 = sbr.rel (0) target = $region37
  $region36: #{cnn_forward.1} parent=0 // pred_region
    _
  $region37: #{cnn_forward.1} parent=0 // pred_fallthru
    _
  // Predicated region
  $region38: #{cnn_forward.1} parent=0 // pred_check
    _
  $region39: #{cnn_forward.1} parent=0 // pred_check_branch
    %35 = sbr.rel (0) target = $region41
  $region40: #{cnn_forward.1} parent=0 // pred_region
    _
  $region41: #{cnn_forward.1} parent=0 // pred_fallthru
    _
  // Predicated region
  $region42: #{cnn_forward.1} parent=0 // pred_check
    _
  $region43: #{cnn_forward.1} parent=0 // pred_check_branch
    %37 = sbr.rel (0) target = $region45
  $region44: #{cnn_forward.1} parent=0 // pred_region
    _
  $region45: #{cnn_forward.1} parent=0 // pred_fallthru
    _
  %v38 = vld [vmem:[%s0] sm:$0xff]
  %v39 = vld [vmem:[%s0 + $0x8] sm:$0xff]
  %v40 = vld [vmem:[%s0 + $0x10] sm:$0xff]
  %v41 = vld [vmem:[%s0 + $0x18] sm:$0xff]
  %v42 = vld [vmem:[%s1] sm:$0xff]
  %v43 = vld [vmem:[%s1 + $0x8] sm:$0xff]
  %v44 = vld [vmem:[%s1 + $0x10] sm:$0xff]
  %v45 = vld [vmem:[%s1 + $0x18] sm:$0xff]
  %v46 = vld [vmem:[%s1 + $0x20] sm:$0xff]
  %v47 = vld [vmem:[%s1 + $0x28] sm:$0xff]
  %v48 = vld [vmem:[%s1 + $0x30] sm:$0xff]
  %v49 = vld [vmem:[%s1 + $0x38] sm:$0xff]
  %v50 = vld [vmem:[%s1 + $0x40] sm:$0xff]
  %v51 = vld [vmem:[%s1 + $0x48] sm:$0xff]
  %v52 = vld [vmem:[%s2] sm:$0x3]
  %v54 = vlaneseq
  %v55 = vshrl.u32 %v54, 7
  %v56 = vsub.s32 0, %v55
  %v57 = vrot.slane %v52, %v56
  %v58 = vlaneseq
  %v59 = vshrl.u32 %v58, 7
  %v60 = vsub.s32 1, %v59
  %v61 = vrot.slane %v52, %v60
  %vm64 = vcmask 326656
  %v66 = vsel %vm64, %v38, 0
  %v69 = vsel %vm64, %v39, 0
  %v72 = vsel %vm64, %v40, 0
  %v75 = vsel %vm64, %v41, 0
  %77 = vmatprep.subr.mxu0 0.0
  %78 = vmatpush1.msra.mxu0 0.0
  %79 = vmatprep.subr.mxu0 0.0
  %80 = vmatpush1.msra.mxu0 0.0
  %81 = vmatprep.subr.mxu0 0.0
  %82 = vmatpush1.msra.mxu0 0.0
  %83 = vmatprep.subr.mxu0 0.0
  %84 = vmatpush1.msra.mxu0 0.0
  %85 = vmatprep.subr.mxu0 0.0
  %86 = vmatpush1.msra.mxu0 0.0
  %87 = vmatprep.subr.mxu0 0.0
  %88 = vmatpush1.msra.mxu0 0.0
  %89 = vmatprep.subr.mxu0 0.0
  %90 = vmatpush1.msra.mxu0 0.0
  %91 = vmatprep.subr.mxu0 0.0
  %92 = vmatpush1.msra.mxu0 0.0
  %93 = vmatprep.subr.mxu0 0.0
  %94 = vmatpush1.msra.mxu0 0.0
  %95 = vmatprep.subr.mxu0 0.0
  %96 = vmatpush1.msra.mxu0 0.0
  %97 = vmatprep.subr.mxu0 0.0
  %98 = vmatpush1.msra.mxu0 0.0
  %99 = vmatprep.subr.mxu0 %v51
  %100 = vmatpush1.msra.mxu0 %v50
  %101 = vmatprep.subr.mxu0 %v49
  %102 = vmatpush1.msra.mxu0 %v48
  %103 = vmatprep.subr.mxu0 %v47
  %104 = vmatpush1.msra.mxu0 %v46
  %105 = vmatprep.subr.mxu0 %v45
  %106 = vmatpush1.msra.mxu0 %v44
  %107 = vmatprep.subr.mxu0 %v43
  %108 = vmatpush1.msra.mxu0 %v42
  %109 = vmatprep.subr.mxu0 0.0
  %110 = vmatpush2.msra.mxu0 0.0
  %111 = vmatprep.subr.mxu0 0.0
  %112 = vmatpush2.msra.mxu0 0.0
  %113 = vmatprep.subr.mxu0 0.0
  %114 = vmatpush2.msra.mxu0 0.0
  %115 = vmatprep.subr.mxu0 0.0
  %116 = vmatpush2.msra.mxu0 0.0
  %117 = vmatprep.subr.mxu0 0.0
  %118 = vmatpush2.msra.mxu0 0.0
  %119 = vmatprep.subr.mxu0 0.0
  %120 = vmatpush2.msra.mxu0 0.0
  %121 = vmatprep.subr.mxu0 0.0
  %122 = vmatpush2.msra.mxu0 0.0
  %123 = vmatprep.subr.mxu0 0.0
  %124 = vmatpush2.msra.mxu0 0.0
  %125 = vmatprep.subr.mxu0 0.0
  %126 = vmatpush2.msra.mxu0 0.0
  %127 = vmatprep.subr.mxu0 0.0
  %128 = vmatpush2.msra.mxu0 0.0
  %129 = vmatprep.subr.mxu0 0.0
  %130 = vmatpush2.msra.mxu0 0.0
  %131 = vmatprep.subr.mxu0 0.0
  %132 = vmatpush2.msra.mxu0 0.0
  %133 = vmatprep.subr.mxu0 0.0
  %134 = vmatpush2.msra.mxu0 0.0
  %135 = vmatprep.subr.mxu0 0.0
  %136 = vmatpush2.msra.mxu0 0.0
  %137 = vmatprep.subr.mxu0 0.0
  %138 = vmatpush2.msra.mxu0 0.0
  %139 = vmatprep.subr.mxu0 0.0
  %140 = vmatpush2.msra.mxu0 0.0
  %141 = vmatprep.mubr.f32.mxu0 0.0
  %142 = vmatmul.mubr.f32.gmra.mxu0 %v66
  %v143 = vpop.f32.mrf.mxu0
  %v144 = vadd.f32 %v57, %v143
  %v145 = vpop.f32.mrf.mxu0
  %v146 = vadd.f32 %v61, %v145
  %147 = vmatprep.mubr.f32.mxu0 0.0
  %148 = vmatmul.mubr.f32.gmra.mxu0 %v69
  %v149 = vpop.f32.mrf.mxu0
  %v150 = vadd.f32 %v57, %v149
  %v151 = vpop.f32.mrf.mxu0
  %v152 = vadd.f32 %v61, %v151
  %153 = vmatprep.mubr.f32.mxu0 0.0
  %154 = vmatmul.mubr.f32.gmra.mxu0 %v72
  %v155 = vpop.f32.mrf.mxu0
  %v156 = vadd.f32 %v57, %v155
  %v157 = vpop.f32.mrf.mxu0
  %v158 = vadd.f32 %v61, %v157
  %159 = vmatprep.mubr.f32.mxu0 0.0
  %160 = vmatmul.mubr.f32.gmra.mxu0 %v75
  %v161 = vpop.f32.mrf.mxu0
  %v162 = vadd.f32 %v57, %v161
  %v163 = vpop.f32.mrf.mxu0
  %v164 = vadd.f32 %v61, %v163
  %165 = vdwg.mxu0
  %v166 = vmax.f32 %v144, %v146
  %v167 = vmax.f32 %v150, %v152
  %v168 = vmax.f32 %v156, %v158
  %v169 = vmax.f32 %v162, %v164
  %v170 = vmax.f32 %v166, 0.0
  %v171 = vmax.f32 %v167, 0.0
  %v172 = vmax.f32 %v168, 0.0
  %v173 = vmax.f32 %v169, 0.0
  %v174 = vlaneseq
  %v175 = vshrl.u32 %v174, 7
  %v176 = vadd.s32 %v175, 8
  %v177 = vadd.s32 %v175, 16
  %v178 = vadd.s32 %v175, 24
  %v179 = vlaneseq
  %v180 = vand.u32 %v179, 127
  %vm181 = vcmp.ge.s32.totalorder %v175, 8
  %vm182 = vcmp.ge.s32.totalorder %v176, 8
  %vm183 = vcmp.ge.s32.totalorder %v177, 8
  %vm184 = vcmp.ge.s32.totalorder %v178, 8
  %vm185 = vcmp.ge.s32.totalorder %v180, 32
  %vm186 = vmor %vm181, %vm185
  %vm187 = vmor %vm182, %vm185
  %vm188 = vmor %vm183, %vm185
  %vm189 = vmor %vm184, %vm185
  %vm190 = vcmp.lt.s32.totalorder %v175, 24
  %vm191 = vcmp.lt.s32.totalorder %v176, 24
  %vm192 = vcmp.lt.s32.totalorder %v177, 24
  %vm193 = vcmp.lt.s32.totalorder %v178, 24
  %vm194 = vcmp.lt.s32.totalorder %v180, 96
  %vm195 = vmor %vm190, %vm194
  %vm196 = vmor %vm191, %vm194
  %vm197 = vmor %vm192, %vm194
  %vm198 = vmor %vm193, %vm194
  %vm199 = vmand %vm186, %vm195
  %vm200 = vmand %vm187, %vm196
  %vm201 = vmand %vm188, %vm197
  %vm202 = vmand %vm189, %vm198
  %v203 = vsel %vm199, %v170, 0.0
  %v204 = vsel %vm200, %v171, 0.0
  %v205 = vsel %vm201, %v172, 0.0
  %v206 = vsel %vm202, %v173, 0.0
  %v207 = vld [vmem:[%s3] sm:$0xff]
  %v208 = vld [vmem:[%s3 + $0x8] sm:$0xff]
  %v209 = vld [vmem:[%s3 + $0x10] sm:$0xff]
  %v210 = vld [vmem:[%s3 + $0x18] sm:$0xff]
  %v211 = vld [vmem:[%s3 + $0x20] sm:$0xff]
  %v212 = vld [vmem:[%s3 + $0x28] sm:$0xff]
  %v213 = vld [vmem:[%s3 + $0x30] sm:$0xff]
  %v214 = vld [vmem:[%s3 + $0x38] sm:$0xff]
  %v215 = vld [vmem:[%s3 + $0x40] sm:$0xff]
  %v216 = vld [vmem:[%s3 + $0x48] sm:$0xff]
  %v217 = vld [vmem:[%s3 + $0x50] sm:$0xff]
  %v218 = vld [vmem:[%s3 + $0x58] sm:$0xff]
  %v219 = vld [vmem:[%s3 + $0x60] sm:$0xff]
  %v220 = vld [vmem:[%s3 + $0x68] sm:$0xff]
  %v221 = vld [vmem:[%s3 + $0x70] sm:$0xff]
  %v222 = vld [vmem:[%s3 + $0x78] sm:$0xff]
  %v223 = vld [vmem:[%s4] sm:$0x1]
  %v225 = vlaneseq
  %v226 = vshrl.u32 %v225, 7
  %v227 = vsub.s32 0, %v226
  %v228 = vrot.slane %v223, %v227
  %230 = vmatprep.subr.mxu0 0.0
  %231 = vmatpush1.msra.mxu0 %v222
  %232 = vmatprep.subr.mxu0 0.0
  %233 = vmatpush1.msra.mxu0 %v221
  %234 = vmatprep.subr.mxu0 0.0
  %235 = vmatpush1.msra.mxu0 %v220
  %236 = vmatprep.subr.mxu0 0.0
  %237 = vmatpush1.msra.mxu0 %v219
  %238 = vmatprep.subr.mxu0 0.0
  %239 = vmatpush1.msra.mxu0 %v218
  %240 = vmatprep.subr.mxu0 0.0
  %241 = vmatpush1.msra.mxu0 %v217
  %242 = vmatprep.subr.mxu0 0.0
  %243 = vmatpush1.msra.mxu0 %v216
  %244 = vmatprep.subr.mxu0 0.0
  %245 = vmatpush1.msra.mxu0 %v215
  %246 = vmatprep.subr.mxu0 0.0
  %247 = vmatpush1.msra.mxu0 %v214
  %248 = vmatprep.subr.mxu0 0.0
  %249 = vmatpush1.msra.mxu0 %v213
  %250 = vmatprep.subr.mxu0 0.0
  %251 = vmatpush1.msra.mxu0 %v212
  %252 = vmatprep.subr.mxu0 0.0
  %253 = vmatpush1.msra.mxu0 %v211
  %254 = vmatprep.subr.mxu0 0.0
  %255 = vmatpush1.msra.mxu0 %v210
  %256 = vmatprep.subr.mxu0 0.0
  %257 = vmatpush1.msra.mxu0 %v209
  %258 = vmatprep.subr.mxu0 0.0
  %259 = vmatpush1.msra.mxu0 %v208
  %260 = vmatprep.subr.mxu0 0.0
  %261 = vmatpush1.msra.mxu0 %v207
  %262 = vmatprep.subr.mxu0 0.0
  %263 = vmatpush2.msra.mxu0 0.0
  %264 = vmatprep.subr.mxu0 0.0
  %265 = vmatpush2.msra.mxu0 0.0
  %266 = vmatprep.subr.mxu0 0.0
  %267 = vmatpush2.msra.mxu0 0.0
  %268 = vmatprep.subr.mxu0 0.0
  %269 = vmatpush2.msra.mxu0 0.0
  %270 = vmatprep.subr.mxu0 0.0
  %271 = vmatpush2.msra.mxu0 0.0
  %272 = vmatprep.subr.mxu0 0.0
  %273 = vmatpush2.msra.mxu0 0.0
  %274 = vmatprep.subr.mxu0 0.0
  %275 = vmatpush2.msra.mxu0 0.0
  %276 = vmatprep.subr.mxu0 0.0
  %277 = vmatpush2.msra.mxu0 0.0
  %278 = vmatprep.subr.mxu0 0.0
  %279 = vmatpush2.msra.mxu0 0.0
  %280 = vmatprep.subr.mxu0 0.0
  %281 = vmatpush2.msra.mxu0 0.0
  %282 = vmatprep.subr.mxu0 0.0
  %283 = vmatpush2.msra.mxu0 0.0
  %284 = vmatprep.subr.mxu0 0.0
  %285 = vmatpush2.msra.mxu0 0.0
  %286 = vmatprep.subr.mxu0 0.0
  %287 = vmatpush2.msra.mxu0 0.0
  %288 = vmatprep.subr.mxu0 0.0
  %289 = vmatpush2.msra.mxu0 0.0
  %290 = vmatprep.subr.mxu0 0.0
  %291 = vmatpush2.msra.mxu0 0.0
  %292 = vmatprep.subr.mxu0 0.0
  %293 = vmatpush2.msra.mxu0 0.0
  %294 = vmatprep.mubr.f32.mxu0 0.0
  %295 = vmatmul.mubr.f32.gmra.mxu0 %v203
  %v296 = vpop.f32.mrf.mxu0
  %v297 = vadd.f32 %v228, %v296
  %v298 = vpop.f32.mrf.mxu0
  %299 = vmatprep.mubr.f32.mxu0 0.0
  %300 = vmatmul.mubr.f32.gmra.mxu0 %v204
  %v301 = vpop.f32.mrf.mxu0
  %v302 = vadd.f32 %v228, %v301
  %v303 = vpop.f32.mrf.mxu0
  %304 = vmatprep.mubr.f32.mxu0 0.0
  %305 = vmatmul.mubr.f32.gmra.mxu0 %v205
  %v306 = vpop.f32.mrf.mxu0
  %v307 = vadd.f32 %v228, %v306
  %v308 = vpop.f32.mrf.mxu0
  %309 = vmatprep.mubr.f32.mxu0 0.0
  %310 = vmatmul.mubr.f32.gmra.mxu0 %v206
  %v311 = vpop.f32.mrf.mxu0
  %v312 = vadd.f32 %v228, %v311
  %v313 = vpop.f32.mrf.mxu0
  %314 = vdwg.mxu0
  %319 = vrot.lane.b32.xlu0 %v297, 64
  %v320 = vpop.permute.xlu0 %319
  %321 = vrot.lane.b32.xlu0 %v302, 64
  %v322 = vpop.permute.xlu0 %321
  %323 = vrot.lane.b32.xlu0 %v307, 64
  %v324 = vpop.permute.xlu0 %323
  %325 = vrot.lane.b32.xlu0 %v312, 64
  %v326 = vpop.permute.xlu0 %325
  %v331 = vmax.f32 %v297, %v320
  %v332 = vmax.f32 %v302, %v322
  %v333 = vmax.f32 %v307, %v324
  %v334 = vmax.f32 %v312, %v326
  %v335 = vmax.f32 %v331, 0.0
  %v336 = vmax.f32 %v332, 0.0
  %v337 = vmax.f32 %v333, 0.0
  %v338 = vmax.f32 %v334, 0.0
  %v339 = vld [vmem:[%s5] sm:$0xff]
  %v340 = vld [vmem:[%s5 + $0x8] sm:$0xff]
  %v341 = vld [vmem:[%s5 + $0x10] sm:$0xff]
  %v342 = vld [vmem:[%s5 + $0x18] sm:$0xff]
  %v343 = vld [vmem:[%s5 + $0x20] sm:$0xff]
  %v344 = vld [vmem:[%s5 + $0x28] sm:$0xff]
  %v345 = vld [vmem:[%s5 + $0x30] sm:$0xff]
  %v346 = vld [vmem:[%s5 + $0x38] sm:$0xff]
  %v347 = vld [vmem:[%s5 + $0x40] sm:$0xff]
  %v348 = vld [vmem:[%s5 + $0x48] sm:$0xff]
  %v349 = vld [vmem:[%s5 + $0x50] sm:$0xff]
  %v350 = vld [vmem:[%s5 + $0x58] sm:$0xff]
  %v351 = vld [vmem:[%s5 + $0x60] sm:$0xff]
  %v352 = vld [vmem:[%s5 + $0x68] sm:$0xff]
  %v353 = vld [vmem:[%s5 + $0x70] sm:$0xff]
  %v354 = vld [vmem:[%s5 + $0x78] sm:$0xff]
  %vm355 = vcmask 523264
  %v357 = vsel %vm355, %v336, 0
  %359 = vmatprep.subr.mxu0 0.0
  %360 = vmatpush1.msra.mxu0 0.0
  %361 = vmatprep.subr.mxu0 0.0
  %362 = vmatpush1.msra.mxu0 0.0
  %363 = vmatprep.subr.mxu0 0.0
  %364 = vmatpush1.msra.mxu0 0.0
  %365 = vmatprep.subr.mxu0 0.0
  %366 = vmatpush1.msra.mxu0 0.0
  %367 = vmatprep.subr.mxu0 0.0
  %368 = vmatpush1.msra.mxu0 0.0
  %369 = vmatprep.subr.mxu0 0.0
  %370 = vmatpush1.msra.mxu0 0.0
  %371 = vmatprep.subr.mxu0 0.0
  %372 = vmatpush1.msra.mxu0 0.0
  %373 = vmatprep.subr.mxu0 0.0
  %374 = vmatpush1.msra.mxu0 0.0
  %375 = vmatprep.subr.mxu0 0.0
  %376 = vmatpush1.msra.mxu0 %v354
  %377 = vmatprep.subr.mxu0 0.0
  %378 = vmatpush1.msra.mxu0 %v353
  %379 = vmatprep.subr.mxu0 0.0
  %380 = vmatpush1.msra.mxu0 %v352
  %381 = vmatprep.subr.mxu0 0.0
  %382 = vmatpush1.msra.mxu0 %v351
  %383 = vmatprep.subr.mxu0 0.0
  %384 = vmatpush1.msra.mxu0 %v350
  %385 = vmatprep.subr.mxu0 0.0
  %386 = vmatpush1.msra.mxu0 %v349
  %387 = vmatprep.subr.mxu0 0.0
  %388 = vmatpush1.msra.mxu0 %v348
  %389 = vmatprep.subr.mxu0 0.0
  %390 = vmatpush1.msra.mxu0 %v347
  %391 = vmatprep.subr.mxu0 0.0
  %392 = vmatpush2.msra.mxu0 0.0
  %393 = vmatprep.subr.mxu0 0.0
  %394 = vmatpush2.msra.mxu0 0.0
  %395 = vmatprep.subr.mxu0 0.0
  %396 = vmatpush2.msra.mxu0 0.0
  %397 = vmatprep.subr.mxu0 0.0
  %398 = vmatpush2.msra.mxu0 0.0
  %399 = vmatprep.subr.mxu0 0.0
  %400 = vmatpush2.msra.mxu0 0.0
  %401 = vmatprep.subr.mxu0 0.0
  %402 = vmatpush2.msra.mxu0 0.0
  %403 = vmatprep.subr.mxu0 0.0
  %404 = vmatpush2.msra.mxu0 0.0
  %405 = vmatprep.subr.mxu0 0.0
  %406 = vmatpush2.msra.mxu0 0.0
  %407 = vmatprep.subr.mxu0 0.0
  %408 = vmatpush2.msra.mxu0 0.0
  %409 = vmatprep.subr.mxu0 0.0
  %410 = vmatpush2.msra.mxu0 0.0
  %411 = vmatprep.subr.mxu0 0.0
  %412 = vmatpush2.msra.mxu0 0.0
  %413 = vmatprep.subr.mxu0 0.0
  %414 = vmatpush2.msra.mxu0 0.0
  %415 = vmatprep.subr.mxu0 0.0
  %416 = vmatpush2.msra.mxu0 0.0
  %417 = vmatprep.subr.mxu0 0.0
  %418 = vmatpush2.msra.mxu0 0.0
  %419 = vmatprep.subr.mxu0 0.0
  %420 = vmatpush2.msra.mxu0 0.0
  %421 = vmatprep.subr.mxu0 0.0
  %422 = vmatpush2.msra.mxu0 0.0
  %423 = vmatprep.mubr.f32.mxu0 0.0
  %424 = vmatmul.mubr.f32.gmra.mxu0 %v357
  %v425 = vpop.f32.mrf.mxu0
  %v426 = vadd.f32 0.0, %v425
  %v427 = vpop.f32.mrf.mxu0
  %428 = vdwg.mxu0
  %v430 = vsel %vm355, %v335, 0
  %432 = vmatprep.subr.mxu0 0.0
  %433 = vmatpush1.msra.mxu0 0.0
  %434 = vmatprep.subr.mxu0 0.0
  %435 = vmatpush1.msra.mxu0 0.0
  %436 = vmatprep.subr.mxu0 0.0
  %437 = vmatpush1.msra.mxu0 0.0
  %438 = vmatprep.subr.mxu0 0.0
  %439 = vmatpush1.msra.mxu0 0.0
  %440 = vmatprep.subr.mxu0 0.0
  %441 = vmatpush1.msra.mxu0 0.0
  %442 = vmatprep.subr.mxu0 0.0
  %443 = vmatpush1.msra.mxu0 0.0
  %444 = vmatprep.subr.mxu0 0.0
  %445 = vmatpush1.msra.mxu0 0.0
  %446 = vmatprep.subr.mxu0 0.0
  %447 = vmatpush1.msra.mxu0 0.0
  %448 = vmatprep.subr.mxu0 0.0
  %449 = vmatpush1.msra.mxu0 %v346
  %450 = vmatprep.subr.mxu0 0.0
  %451 = vmatpush1.msra.mxu0 %v345
  %452 = vmatprep.subr.mxu0 0.0
  %453 = vmatpush1.msra.mxu0 %v344
  %454 = vmatprep.subr.mxu0 0.0
  %455 = vmatpush1.msra.mxu0 %v343
  %456 = vmatprep.subr.mxu0 0.0
  %457 = vmatpush1.msra.mxu0 %v342
  %458 = vmatprep.subr.mxu0 0.0
  %459 = vmatpush1.msra.mxu0 %v341
  %460 = vmatprep.subr.mxu0 0.0
  %461 = vmatpush1.msra.mxu0 %v340
  %462 = vmatprep.subr.mxu0 0.0
  %463 = vmatpush1.msra.mxu0 %v339
  %464 = vmatprep.subr.mxu0 0.0
  %465 = vmatpush2.msra.mxu0 0.0
  %466 = vmatprep.subr.mxu0 0.0
  %467 = vmatpush2.msra.mxu0 0.0
  %468 = vmatprep.subr.mxu0 0.0
  %469 = vmatpush2.msra.mxu0 0.0
  %470 = vmatprep.subr.mxu0 0.0
  %471 = vmatpush2.msra.mxu0 0.0
  %472 = vmatprep.subr.mxu0 0.0
  %473 = vmatpush2.msra.mxu0 0.0
  %474 = vmatprep.subr.mxu0 0.0
  %475 = vmatpush2.msra.mxu0 0.0
  %476 = vmatprep.subr.mxu0 0.0
  %477 = vmatpush2.msra.mxu0 0.0
  %478 = vmatprep.subr.mxu0 0.0
  %479 = vmatpush2.msra.mxu0 0.0
  %480 = vmatprep.subr.mxu0 0.0
  %481 = vmatpush2.msra.mxu0 0.0
  %482 = vmatprep.subr.mxu0 0.0
  %483 = vmatpush2.msra.mxu0 0.0
  %484 = vmatprep.subr.mxu0 0.0
  %485 = vmatpush2.msra.mxu0 0.0
  %486 = vmatprep.subr.mxu0 0.0
  %487 = vmatpush2.msra.mxu0 0.0
  %488 = vmatprep.subr.mxu0 0.0
  %489 = vmatpush2.msra.mxu0 0.0
  %490 = vmatprep.subr.mxu0 0.0
  %491 = vmatpush2.msra.mxu0 0.0
  %492 = vmatprep.subr.mxu0 0.0
  %493 = vmatpush2.msra.mxu0 0.0
  %494 = vmatprep.subr.mxu0 0.0
  %495 = vmatpush2.msra.mxu0 0.0
  %496 = vmatprep.mubr.f32.mxu0 0.0
  %497 = vmatmul.mubr.f32.gmra.mxu0 %v430
  %v498 = vpop.f32.mrf.mxu0
  %v499 = vadd.f32 %v426, %v498
  %v500 = vpop.f32.mrf.mxu0
  %501 = vdwg.mxu0
  %v502 = vld [vmem:[%s5 + $0x80] sm:$0xff]
  %v503 = vld [vmem:[%s5 + $0x88] sm:$0xff]
  %v504 = vld [vmem:[%s5 + $0x90] sm:$0xff]
  %v505 = vld [vmem:[%s5 + $0x98] sm:$0xff]
  %v506 = vld [vmem:[%s5 + $0xa0] sm:$0xff]
  %v507 = vld [vmem:[%s5 + $0xa8] sm:$0xff]
  %v508 = vld [vmem:[%s5 + $0xb0] sm:$0xff]
  %v509 = vld [vmem:[%s5 + $0xb8] sm:$0xff]
  %v511 = vsel %vm355, %v337, 0
  %513 = vmatprep.subr.mxu0 0.0
  %514 = vmatpush1.msra.mxu0 0.0
  %515 = vmatprep.subr.mxu0 0.0
  %516 = vmatpush1.msra.mxu0 0.0
  %517 = vmatprep.subr.mxu0 0.0
  %518 = vmatpush1.msra.mxu0 0.0
  %519 = vmatprep.subr.mxu0 0.0
  %520 = vmatpush1.msra.mxu0 0.0
  %521 = vmatprep.subr.mxu0 0.0
  %522 = vmatpush1.msra.mxu0 0.0
  %523 = vmatprep.subr.mxu0 0.0
  %524 = vmatpush1.msra.mxu0 0.0
  %525 = vmatprep.subr.mxu0 0.0
  %526 = vmatpush1.msra.mxu0 0.0
  %527 = vmatprep.subr.mxu0 0.0
  %528 = vmatpush1.msra.mxu0 0.0
  %529 = vmatprep.subr.mxu0 0.0
  %530 = vmatpush1.msra.mxu0 %v509
  %531 = vmatprep.subr.mxu0 0.0
  %532 = vmatpush1.msra.mxu0 %v508
  %533 = vmatprep.subr.mxu0 0.0
  %534 = vmatpush1.msra.mxu0 %v507
  %535 = vmatprep.subr.mxu0 0.0
  %536 = vmatpush1.msra.mxu0 %v506
  %537 = vmatprep.subr.mxu0 0.0
  %538 = vmatpush1.msra.mxu0 %v505
  %539 = vmatprep.subr.mxu0 0.0
  %540 = vmatpush1.msra.mxu0 %v504
  %541 = vmatprep.subr.mxu0 0.0
  %542 = vmatpush1.msra.mxu0 %v503
  %543 = vmatprep.subr.mxu0 0.0
  %544 = vmatpush1.msra.mxu0 %v502
  %545 = vmatprep.subr.mxu0 0.0
  %546 = vmatpush2.msra.mxu0 0.0
  %547 = vmatprep.subr.mxu0 0.0
  %548 = vmatpush2.msra.mxu0 0.0
  %549 = vmatprep.subr.mxu0 0.0
  %550 = vmatpush2.msra.mxu0 0.0
  %551 = vmatprep.subr.mxu0 0.0
  %552 = vmatpush2.msra.mxu0 0.0
  %553 = vmatprep.subr.mxu0 0.0
  %554 = vmatpush2.msra.mxu0 0.0
  %555 = vmatprep.subr.mxu0 0.0
  %556 = vmatpush2.msra.mxu0 0.0
  %557 = vmatprep.subr.mxu0 0.0
  %558 = vmatpush2.msra.mxu0 0.0
  %559 = vmatprep.subr.mxu0 0.0
  %560 = vmatpush2.msra.mxu0 0.0
  %561 = vmatprep.subr.mxu0 0.0
  %562 = vmatpush2.msra.mxu0 0.0
  %563 = vmatprep.subr.mxu0 0.0
  %564 = vmatpush2.msra.mxu0 0.0
  %565 = vmatprep.subr.mxu0 0.0
  %566 = vmatpush2.msra.mxu0 0.0
  %567 = vmatprep.subr.mxu0 0.0
  %568 = vmatpush2.msra.mxu0 0.0
  %569 = vmatprep.subr.mxu0 0.0
  %570 = vmatpush2.msra.mxu0 0.0
  %571 = vmatprep.subr.mxu0 0.0
  %572 = vmatpush2.msra.mxu0 0.0
  %573 = vmatprep.subr.mxu0 0.0
  %574 = vmatpush2.msra.mxu0 0.0
  %575 = vmatprep.subr.mxu0 0.0
  %576 = vmatpush2.msra.mxu0 0.0
  %577 = vmatprep.mubr.f32.mxu0 0.0
  %578 = vmatmul.mubr.f32.gmra.mxu0 %v511
  %v579 = vpop.f32.mrf.mxu0
  %v580 = vadd.f32 0.0, %v579
  %v581 = vpop.f32.mrf.mxu0
  %582 = vdwg.mxu0
  %v583 = vadd.f32 %v499, %v580
  %v584 = vld [vmem:[%s5 + $0xc0] sm:$0xff]
  %v585 = vld [vmem:[%s5 + $0xc8] sm:$0xff]
  %v586 = vld [vmem:[%s5 + $0xd0] sm:$0xff]
  %v587 = vld [vmem:[%s5 + $0xd8] sm:$0xff]
  %v588 = vld [vmem:[%s5 + $0xe0] sm:$0xff]
  %v589 = vld [vmem:[%s5 + $0xe8] sm:$0xff]
  %v590 = vld [vmem:[%s5 + $0xf0] sm:$0xff]
  %v591 = vld [vmem:[%s5 + $0xf8] sm:$0xff]
  %v593 = vsel %vm355, %v338, 0
  %595 = vmatprep.subr.mxu0 0.0
  %596 = vmatpush1.msra.mxu0 0.0
  %597 = vmatprep.subr.mxu0 0.0
  %598 = vmatpush1.msra.mxu0 0.0
  %599 = vmatprep.subr.mxu0 0.0
  %600 = vmatpush1.msra.mxu0 0.0
  %601 = vmatprep.subr.mxu0 0.0
  %602 = vmatpush1.msra.mxu0 0.0
  %603 = vmatprep.subr.mxu0 0.0
  %604 = vmatpush1.msra.mxu0 0.0
  %605 = vmatprep.subr.mxu0 0.0
  %606 = vmatpush1.msra.mxu0 0.0
  %607 = vmatprep.subr.mxu0 0.0
  %608 = vmatpush1.msra.mxu0 0.0
  %609 = vmatprep.subr.mxu0 0.0
  %610 = vmatpush1.msra.mxu0 0.0
  %611 = vmatprep.subr.mxu0 0.0
  %612 = vmatpush1.msra.mxu0 %v591
  %613 = vmatprep.subr.mxu0 0.0
  %614 = vmatpush1.msra.mxu0 %v590
  %615 = vmatprep.subr.mxu0 0.0
  %616 = vmatpush1.msra.mxu0 %v589
  %617 = vmatprep.subr.mxu0 0.0
  %618 = vmatpush1.msra.mxu0 %v588
  %619 = vmatprep.subr.mxu0 0.0
  %620 = vmatpush1.msra.mxu0 %v587
  %621 = vmatprep.subr.mxu0 0.0
  %622 = vmatpush1.msra.mxu0 %v586
  %623 = vmatprep.subr.mxu0 0.0
  %624 = vmatpush1.msra.mxu0 %v585
  %625 = vmatprep.subr.mxu0 0.0
  %626 = vmatpush1.msra.mxu0 %v584
  %627 = vmatprep.subr.mxu0 0.0
  %628 = vmatpush2.msra.mxu0 0.0
  %629 = vmatprep.subr.mxu0 0.0
  %630 = vmatpush2.msra.mxu0 0.0
  %631 = vmatprep.subr.mxu0 0.0
  %632 = vmatpush2.msra.mxu0 0.0
  %633 = vmatprep.subr.mxu0 0.0
  %634 = vmatpush2.msra.mxu0 0.0
  %635 = vmatprep.subr.mxu0 0.0
  %636 = vmatpush2.msra.mxu0 0.0
  %637 = vmatprep.subr.mxu0 0.0
  %638 = vmatpush2.msra.mxu0 0.0
  %639 = vmatprep.subr.mxu0 0.0
  %640 = vmatpush2.msra.mxu0 0.0
  %641 = vmatprep.subr.mxu0 0.0
  %642 = vmatpush2.msra.mxu0 0.0
  %643 = vmatprep.subr.mxu0 0.0
  %644 = vmatpush2.msra.mxu0 0.0
  %645 = vmatprep.subr.mxu0 0.0
  %646 = vmatpush2.msra.mxu0 0.0
  %647 = vmatprep.subr.mxu0 0.0
  %648 = vmatpush2.msra.mxu0 0.0
  %649 = vmatprep.subr.mxu0 0.0
  %650 = vmatpush2.msra.mxu0 0.0
  %651 = vmatprep.subr.mxu0 0.0
  %652 = vmatpush2.msra.mxu0 0.0
  %653 = vmatprep.subr.mxu0 0.0
  %654 = vmatpush2.msra.mxu0 0.0
  %655 = vmatprep.subr.mxu0 0.0
  %656 = vmatpush2.msra.mxu0 0.0
  %657 = vmatprep.subr.mxu0 0.0
  %658 = vmatpush2.msra.mxu0 0.0
  %659 = vmatprep.mubr.f32.mxu0 0.0
  %660 = vmatmul.mubr.f32.gmra.mxu0 %v593
  %v661 = vpop.f32.mrf.mxu0
  %v662 = vadd.f32 0.0, %v661
  %v663 = vpop.f32.mrf.mxu0
  %664 = vdwg.mxu0
  %v665 = vadd.f32 %v583, %v662
  %v666 = vld [vmem:[%s6] sm:$0x1]
  %v668 = vlaneseq
  %v669 = vshrl.u32 %v668, 7
  %v670 = vsub.s32 0, %v669
  %v671 = vrot.slane %v666, %v670
  %v673 = vadd.f32 %v665, %v671
  %v674 = vmax.f32 %v673, 0.0
  %v675 = vld [vmem:[%s7] sm:$0xff]
  %v676 = vld [vmem:[%s7 + $0x8] sm:$0xff]
  %v677 = vld [vmem:[%s7 + $0x10] sm:$0xff]
  %v678 = vld [vmem:[%s7 + $0x18] sm:$0xff]
  %v679 = vld [vmem:[%s7 + $0x20] sm:$0xff]
  %v680 = vld [vmem:[%s7 + $0x28] sm:$0xff]
  %v681 = vld [vmem:[%s7 + $0x30] sm:$0xff]
  %v682 = vld [vmem:[%s7 + $0x38] sm:$0xff]
  %v683 = vld [vmem:[%s7 + $0x40] sm:$0xff]
  %v684 = vld [vmem:[%s7 + $0x48] sm:$0xff]
  %v685 = vld [vmem:[%s7 + $0x50] sm:$0xff]
  %v686 = vld [vmem:[%s7 + $0x58] sm:$0xff]
  %v687 = vld [vmem:[%s7 + $0x60] sm:$0xff]
  %v688 = vld [vmem:[%s7 + $0x68] sm:$0xff]
  %v689 = vld [vmem:[%s7 + $0x70] sm:$0xff]
  %v690 = vld [vmem:[%s7 + $0x78] sm:$0xff]
  %v691 = vld [vmem:[%s8] sm:$0x1]
  %v693 = vlaneseq
  %v694 = vshrl.u32 %v693, 7
  %v695 = vsub.s32 0, %v694
  %v696 = vrot.slane %v691, %v695
  %698 = vmatprep.subr.mxu0 0.0
  %699 = vmatpush1.msra.mxu0 %v690
  %700 = vmatprep.subr.mxu0 0.0
  %701 = vmatpush1.msra.mxu0 %v689
  %702 = vmatprep.subr.mxu0 0.0
  %703 = vmatpush1.msra.mxu0 %v688
  %704 = vmatprep.subr.mxu0 0.0
  %705 = vmatpush1.msra.mxu0 %v687
  %706 = vmatprep.subr.mxu0 0.0
  %707 = vmatpush1.msra.mxu0 %v686
  %708 = vmatprep.subr.mxu0 0.0
  %709 = vmatpush1.msra.mxu0 %v685
  %710 = vmatprep.subr.mxu0 0.0
  %711 = vmatpush1.msra.mxu0 %v684
  %712 = vmatprep.subr.mxu0 0.0
  %713 = vmatpush1.msra.mxu0 %v683
  %714 = vmatprep.subr.mxu0 0.0
  %715 = vmatpush1.msra.mxu0 %v682
  %716 = vmatprep.subr.mxu0 0.0
  %717 = vmatpush1.msra.mxu0 %v681
  %718 = vmatprep.subr.mxu0 0.0
  %719 = vmatpush1.msra.mxu0 %v680
  %720 = vmatprep.subr.mxu0 0.0
  %721 = vmatpush1.msra.mxu0 %v679
  %722 = vmatprep.subr.mxu0 0.0
  %723 = vmatpush1.msra.mxu0 %v678
  %724 = vmatprep.subr.mxu0 0.0
  %725 = vmatpush1.msra.mxu0 %v677
  %726 = vmatprep.subr.mxu0 0.0
  %727 = vmatpush1.msra.mxu0 %v676
  %728 = vmatprep.subr.mxu0 0.0
  %729 = vmatpush1.msra.mxu0 %v675
  %730 = vmatprep.subr.mxu0 0.0
  %731 = vmatpush2.msra.mxu0 0.0
  %732 = vmatprep.subr.mxu0 0.0
  %733 = vmatpush2.msra.mxu0 0.0
  %734 = vmatprep.subr.mxu0 0.0
  %735 = vmatpush2.msra.mxu0 0.0
  %736 = vmatprep.subr.mxu0 0.0
  %737 = vmatpush2.msra.mxu0 0.0
  %738 = vmatprep.subr.mxu0 0.0
  %739 = vmatpush2.msra.mxu0 0.0
  %740 = vmatprep.subr.mxu0 0.0
  %741 = vmatpush2.msra.mxu0 0.0
  %742 = vmatprep.subr.mxu0 0.0
  %743 = vmatpush2.msra.mxu0 0.0
  %744 = vmatprep.subr.mxu0 0.0
  %745 = vmatpush2.msra.mxu0 0.0
  %746 = vmatprep.subr.mxu0 0.0
  %747 = vmatpush2.msra.mxu0 0.0
  %748 = vmatprep.subr.mxu0 0.0
  %749 = vmatpush2.msra.mxu0 0.0
  %750 = vmatprep.subr.mxu0 0.0
  %751 = vmatpush2.msra.mxu0 0.0
  %752 = vmatprep.subr.mxu0 0.0
  %753 = vmatpush2.msra.mxu0 0.0
  %754 = vmatprep.subr.mxu0 0.0
  %755 = vmatpush2.msra.mxu0 0.0
  %756 = vmatprep.subr.mxu0 0.0
  %757 = vmatpush2.msra.mxu0 0.0
  %758 = vmatprep.subr.mxu0 0.0
  %759 = vmatpush2.msra.mxu0 0.0
  %760 = vmatprep.subr.mxu0 0.0
  %761 = vmatpush2.msra.mxu0 0.0
  %762 = vmatprep.mubr.f32.mxu0 0.0
  %763 = vmatmul.mubr.f32.gmra.mxu0 %v674
  %v764 = vpop.f32.mrf.mxu0
  %v765 = vadd.f32 %v696, %v764
  %v766 = vpop.f32.mrf.mxu0
  %767 = vdwg.mxu0
  %v768 = vmax.f32 %v765, 0.0
  %v769 = vld [vmem:[%s9] sm:$0xff]
  %v770 = vld [vmem:[%s9 + $0x8] sm:$0xff]
  %v771 = vld [vmem:[%s9 + $0x10] sm:$0xff]
  %v772 = vld [vmem:[%s9 + $0x18] sm:$0xff]
  %v773 = vld [vmem:[%s9 + $0x20] sm:$0xff]
  %v774 = vld [vmem:[%s9 + $0x28] sm:$0xff]
  %v775 = vld [vmem:[%s9 + $0x30] sm:$0xff]
  %v776 = vld [vmem:[%s9 + $0x38] sm:$0xff]
  %v777 = vld [vmem:[%s9 + $0x40] sm:$0xff]
  %v778 = vld [vmem:[%s9 + $0x48] sm:$0xff]
  %v779 = vld [vmem:[%s9 + $0x50] sm:$0xff]
  %v780 = vld [vmem:[%s9 + $0x58] sm:$0xff]
  %v781 = vld [vmem:[%s9 + $0x60] sm:$0xff]
  %v782 = vld [vmem:[%s9 + $0x68] sm:$0xff]
  %v783 = vld [vmem:[%s9 + $0x70] sm:$0xff]
  %v784 = vld [vmem:[%s9 + $0x78] sm:$0xff]
  %v785 = vld [vmem:[%s10] sm:$0x1]
  %v787 = vlaneseq
  %v788 = vshrl.u32 %v787, 7
  %v789 = vsub.s32 0, %v788
  %v790 = vrot.slane %v785, %v789
  %792 = vmatprep.subr.mxu0 0.0
  %793 = vmatpush1.msra.mxu0 %v784
  %794 = vmatprep.subr.mxu0 0.0
  %795 = vmatpush1.msra.mxu0 %v783
  %796 = vmatprep.subr.mxu0 0.0
  %797 = vmatpush1.msra.mxu0 %v782
  %798 = vmatprep.subr.mxu0 0.0
  %799 = vmatpush1.msra.mxu0 %v781
  %800 = vmatprep.subr.mxu0 0.0
  %801 = vmatpush1.msra.mxu0 %v780
  %802 = vmatprep.subr.mxu0 0.0
  %803 = vmatpush1.msra.mxu0 %v779
  %804 = vmatprep.subr.mxu0 0.0
  %805 = vmatpush1.msra.mxu0 %v778
  %806 = vmatprep.subr.mxu0 0.0
  %807 = vmatpush1.msra.mxu0 %v777
  %808 = vmatprep.subr.mxu0 0.0
  %809 = vmatpush1.msra.mxu0 %v776
  %810 = vmatprep.subr.mxu0 0.0
  %811 = vmatpush1.msra.mxu0 %v775
  %812 = vmatprep.subr.mxu0 0.0
  %813 = vmatpush1.msra.mxu0 %v774
  %814 = vmatprep.subr.mxu0 0.0
  %815 = vmatpush1.msra.mxu0 %v773
  %816 = vmatprep.subr.mxu0 0.0
  %817 = vmatpush1.msra.mxu0 %v772
  %818 = vmatprep.subr.mxu0 0.0
  %819 = vmatpush1.msra.mxu0 %v771
  %820 = vmatprep.subr.mxu0 0.0
  %821 = vmatpush1.msra.mxu0 %v770
  %822 = vmatprep.subr.mxu0 0.0
  %823 = vmatpush1.msra.mxu0 %v769
  %824 = vmatprep.subr.mxu0 0.0
  %825 = vmatpush2.msra.mxu0 0.0
  %826 = vmatprep.subr.mxu0 0.0
  %827 = vmatpush2.msra.mxu0 0.0
  %828 = vmatprep.subr.mxu0 0.0
  %829 = vmatpush2.msra.mxu0 0.0
  %830 = vmatprep.subr.mxu0 0.0
  %831 = vmatpush2.msra.mxu0 0.0
  %832 = vmatprep.subr.mxu0 0.0
  %833 = vmatpush2.msra.mxu0 0.0
  %834 = vmatprep.subr.mxu0 0.0
  %835 = vmatpush2.msra.mxu0 0.0
  %836 = vmatprep.subr.mxu0 0.0
  %837 = vmatpush2.msra.mxu0 0.0
  %838 = vmatprep.subr.mxu0 0.0
  %839 = vmatpush2.msra.mxu0 0.0
  %840 = vmatprep.subr.mxu0 0.0
  %841 = vmatpush2.msra.mxu0 0.0
  %842 = vmatprep.subr.mxu0 0.0
  %843 = vmatpush2.msra.mxu0 0.0
  %844 = vmatprep.subr.mxu0 0.0
  %845 = vmatpush2.msra.mxu0 0.0
  %846 = vmatprep.subr.mxu0 0.0
  %847 = vmatpush2.msra.mxu0 0.0
  %848 = vmatprep.subr.mxu0 0.0
  %849 = vmatpush2.msra.mxu0 0.0
  %850 = vmatprep.subr.mxu0 0.0
  %851 = vmatpush2.msra.mxu0 0.0
  %852 = vmatprep.subr.mxu0 0.0
  %853 = vmatpush2.msra.mxu0 0.0
  %854 = vmatprep.subr.mxu0 0.0
  %855 = vmatpush2.msra.mxu0 0.0
  %856 = vmatprep.mubr.f32.mxu0 0.0
  %857 = vmatmul.mubr.f32.gmra.mxu0 %v768
  %v858 = vpop.f32.mrf.mxu0
  %v859 = vadd.f32 %v790, %v858
  %v860 = vpop.f32.mrf.mxu0
  %861 = vdwg.mxu0
  %862 = vst [vmem:[%s11] sm:$0xff] %v859
  // Predicated region
  $region46: #{cnn_forward.1} parent=0 // pred_check
    _
  $region47: #{cnn_forward.1} parent=0 // pred_check_branch
    %864 = sbr.rel (0) target = $region49
  $region48: #{cnn_forward.1} parent=0 // pred_region
    _
  $region49: #{cnn_forward.1} parent=0 // pred_fallthru
    _
  // Predicated region
  $region50: #{cnn_forward.1} parent=0 // pred_check
    _
  $region51: #{cnn_forward.1} parent=0 // pred_check_branch
    %866 = sbr.rel (0) target = $region53
  $region52: #{cnn_forward.1} parent=0 // pred_region
    _
  $region53: #{cnn_forward.1} parent=0 // pred_fallthru
    _

</llo_original>
